<compile_context>
chip_gen: v7x
topology: tpu7x:2x2x1
jax: 0.10.0
libtpu: 0.0.40
codegen_flags: <defaults>
</compile_context>

<pallas_src>
import functools

import jax
import jax.numpy as jnp
from jax.experimental import pallas as pl
from jax.experimental.pallas import tpu as pltpu


# ---------------------------------------------------------------------------
# In-kernel helpers
# ---------------------------------------------------------------------------
def _softmax_lanes(x):
    """Numerically-stable softmax along the last (lane) axis. x: (Bt, L) f32."""
    x = x - jnp.max(x, axis=-1, keepdims=True)
    p = jnp.exp(x)
    denom = jnp.sum(p, axis=-1, keepdims=True)
    return p * pl.reciprocal(denom, approx=True)


def _pool(att, emb):
    """Attention pooling on the VPU (broadcast-multiply + sublane reduce).

    att: (Bt, L) f32 attention weights, emb: (Bt, L, D) -> (Bt, D) f32.
    """
    return jnp.sum(att[:, :, None] * emb.astype(jnp.float32), axis=1)


# ---------------------------------------------------------------------------
# Pallas kernels
# ---------------------------------------------------------------------------
def gap_fused_kernel(src_emb_ref, tgt_emb_ref, neg_emb_ref, a_ref,
                     src_mask_ref, tgt_mask_ref, neg_mask_ref,
                     src_rep_ref, tgt_rep_ref, neg_rep_ref):
    # emb refs: (Bt, L*, D)   a_ref: (D, D)   masks: (Bt, L*) f32
    # outputs: (Bt, D) f32  (lane/sublane dense)
    es = src_emb_ref[...]
    eo = tgt_emb_ref[...]
    en = neg_emb_ref[...]
    A = a_ref[...]
    Bt, Ls, D = es.shape

    # Bilinear projection as one tall MXU matmul, reused for both sims.
    esa = jnp.dot(es.reshape(Bt * Ls, D), A,
                  preferred_element_type=jnp.float32).reshape(Bt, Ls, D)
    # Keep the second matmul on the narrow MXU path when inputs are bf16
    # (no-op for f32 inputs).
    esa_n = esa.astype(es.dtype)

    # sim = tanh(Es^T A E*) -- contraction on the last dim of both operands.
    sim_t = jnp.tanh(jnp.einsum("bqd,bkd->bqk", esa_n, eo,
                                preferred_element_type=jnp.float32))  # (Bt,Ls,Lt)
    sim_n = jnp.tanh(jnp.einsum("bqd,bkd->bqk", esa_n, en,
                                preferred_element_type=jnp.float32))  # (Bt,Ls,Ln)

    # Lane-dense masked softmaxes over the respective sequence axes.
    src_att = _softmax_lanes(jnp.mean(sim_t, axis=2) + src_mask_ref[...])  # (Bt,Ls)
    tgt_att = _softmax_lanes(jnp.mean(sim_t, axis=1) + tgt_mask_ref[...])  # (Bt,Lt)
    neg_att = _softmax_lanes(jnp.mean(sim_n, axis=1) + neg_mask_ref[...])  # (Bt,Ln)

    # Attention pooling on the VPU -> dense (Bt, D) stores.
    src_rep_ref[...] = _pool(src_att, es)
    tgt_rep_ref[...] = _pool(tgt_att, eo)
    neg_rep_ref[...] = _pool(neg_att, en)


def gap_pair_kernel(src_emb_ref, tgt_emb_ref, a_ref,
                    src_mask_ref, tgt_mask_ref,
                    src_rep_ref, tgt_rep_ref):
    es = src_emb_ref[...]
    eo = tgt_emb_ref[...]
    A = a_ref[...]
    Bt, Ls, D = es.shape

    esa = jnp.dot(es.reshape(Bt * Ls, D), A,
                  preferred_element_type=jnp.float32).reshape(Bt, Ls, D)
    esa_n = esa.astype(es.dtype)
    sim_t = jnp.tanh(jnp.einsum("bqd,bkd->bqk", esa_n, eo,
                                preferred_element_type=jnp.float32))

    src_att = _softmax_lanes(jnp.mean(sim_t, axis=2) + src_mask_ref[...])
    tgt_att = _softmax_lanes(jnp.mean(sim_t, axis=1) + tgt_mask_ref[...])

    src_rep_ref[...] = _pool(src_att, es)
    tgt_rep_ref[...] = _pool(tgt_att, eo)


# ---------------------------------------------------------------------------
# Batch-tile selection (generation aware, VMEM capped)
# ---------------------------------------------------------------------------
def _round_up(x, m):
    return -(-x // m) * m


def _pick_batch_tile(B, per_row_bytes, vmem_budget_bytes=8 << 20):
    """Choose the per-step batch tile Bt.

    B <= 8: whole batch in one step (blocks equal full dims -> valid layout).
    B  > 8: multiple of 8 (sublane-dense outputs), capped by a conservative
            scoped-VMEM budget shared by v5e/v6e/v7x, and small enough to
            give >= 2 grid steps so both v7x TensorCores get work.
    """
    if B <= 8:
        return B
    cap = max(8, min(64, vmem_budget_bytes // max(per_row_bytes, 1)))
    cap = (cap // 8) * 8
    two_step = max(8, ((B // 2) // 8) * 8)
    return max(8, min(cap, two_step))


# ---------------------------------------------------------------------------
# Wrapper
# ---------------------------------------------------------------------------
def gap_attention_pool(src_emb, tgt_emb, attention_param, src_mask, tgt_mask,
                       neg_emb=None, neg_mask=None, emb_dtype=jnp.float32):
    """Bilinear-attention pooling for (source, target[, negative]).

    src_emb: (B, Ls, D), tgt_emb: (B, Lt, D), [neg_emb: (B, Ln, D)],
    attention_param: (D, D), masks: (B, L) additive masks.
    Returns (source_rep, target_rep[, negative_rep]) each of shape (B, D) f32.
    """
    B, Ls, D = src_emb.shape
    Lt = tgt_emb.shape[1]
    has_neg = neg_emb is not None
    Ln = neg_emb.shape[1] if has_neg else 0

    emb_bytes = jnp.dtype(emb_dtype).itemsize
    # Per-batch-row VMEM footprint per step: double-buffered emb blocks +
    # f32 sim intermediates + masks + pooled outputs.
    per_row_bytes = (2 * (Ls + Lt + Ln) * D * emb_bytes
                     + Ls * (Lt + Ln) * 4
                     + (Ls + Lt + Ln) * 4
                     + 3 * D * 4)

    Bt = _pick_batch_tile(B, per_row_bytes)
    Bp = _round_up(B, Bt)
    if Bp != B:
        pad = Bp - B

        def _pad(x):
            cfg = [(0, pad)] + [(0, 0)] * (x.ndim - 1)
            return jnp.pad(x, cfg)

        src_emb, tgt_emb = _pad(src_emb), _pad(tgt_emb)
        src_mask, tgt_mask = _pad(src_mask), _pad(tgt_mask)
        if has_neg:
            neg_emb, neg_mask = _pad(neg_emb), _pad(neg_mask)

    grid = (Bp // Bt,)

    # dtype handling: embeddings (and A) may be narrowed to bf16 to halve the
    # DMA bytes and hit the fast MXU path; masks and all softmax math stay f32.
    src_emb = src_emb.astype(emb_dtype)
    tgt_emb = tgt_emb.astype(emb_dtype)
    attention_param = attention_param.astype(emb_dtype)
    src_mask = src_mask.astype(jnp.float32)
    tgt_mask = tgt_mask.astype(jnp.float32)

    def emb_spec(L):
        return pl.BlockSpec((Bt, L, D), lambda i: (i, 0, 0))

    def mask_spec(L):
        return pl.BlockSpec((Bt, L), lambda i: (i, 0))

    a_spec = pl.BlockSpec((D, D), lambda i: (0, 0))
    rep_spec = pl.BlockSpec((Bt, D), lambda i: (i, 0))       # dense 2-D output
    rep_shape = jax.ShapeDtypeStruct((Bp, D), jnp.float32)

    if has_neg:
        neg_emb = neg_emb.astype(emb_dtype)
        neg_mask = neg_mask.astype(jnp.float32)
        kernel = gap_fused_kernel
        in_specs = [emb_spec(Ls), emb_spec(Lt), emb_spec(Ln), a_spec,
                    mask_spec(Ls), mask_spec(Lt), mask_spec(Ln)]
        out_specs = [rep_spec, rep_spec, rep_spec]
        out_shapes = (rep_shape, rep_shape, rep_shape)
        args = (src_emb, tgt_emb, neg_emb, attention_param,
                src_mask, tgt_mask, neg_mask)
        n_out = 3
    else:
        kernel = gap_pair_kernel
        in_specs = [emb_spec(Ls), emb_spec(Lt), a_spec,
                    mask_spec(Ls), mask_spec(Lt)]
        out_specs = [rep_spec, rep_spec]
        out_shapes = (rep_shape, rep_shape)
        args = (src_emb, tgt_emb, attention_param, src_mask, tgt_mask)
        n_out = 2

    # Advisory cost hint so XLA overlaps the embedding gather / pad / cast
    # with this custom call.
    flops = (2 * Bp * Ls * D * D                       # esa projection
             + 2 * Bp * Ls * (Lt + Ln) * D             # sim matmuls
             + 2 * Bp * (Ls + Lt + Ln) * D)            # pooling mul-add
    transcendentals = Bp * Ls * (Lt + Ln) + Bp * (Ls + Lt + Ln)
    bytes_accessed = (Bp * (Ls + Lt + Ln) * D * emb_bytes
                      + D * D * emb_bytes
                      + Bp * (Ls + Lt + Ln) * 4
                      + n_out * Bp * D * 4)
    cost = pl.CostEstimate(flops=int(flops),
                           transcendentals=int(transcendentals),
                           bytes_accessed=int(bytes_accessed))

    per_step_bytes = Bt * per_row_bytes + 2 * D * D * emb_bytes
    vmem_limit = int(min(64 << 20, max(32 << 20, 4 * per_step_bytes)))

    outs = pl.pallas_call(
        kernel,
        out_shape=out_shapes,
        grid_spec=pltpu.PrefetchScalarGridSpec(
            num_scalar_prefetch=0,
            grid=grid,
            in_specs=in_specs,
            out_specs=out_specs),
        compiler_params=pltpu.CompilerParams(
            dimension_semantics=("parallel",),
            vmem_limit_bytes=vmem_limit),
        cost_estimate=cost,
    )(*args)

    return tuple(o[:B, :] for o in outs)


# ---------------------------------------------------------------------------
# Parameter init (deterministic, matching torch's __init__ shapes)
# ---------------------------------------------------------------------------
def init_gap_params(key, num_nodes, emb_dim):
    k_emb, k_att = jax.random.split(key)
    # nn.Embedding(num_nodes + 1, emb_dim), then xavier_uniform_ over the
    # whole weight (this overwrites the padding row too, as in torch).
    fan_in, fan_out = num_nodes + 1, emb_dim
    bound = (6.0 / (fan_in + fan_out)) ** 0.5
    emb_weight = jax.random.uniform(
        k_emb, (num_nodes + 1, emb_dim), jnp.float32, -bound, bound)
    # attention_parameter: (emb_dim, emb_dim), xavier_normal_
    std = (2.0 / (emb_dim + emb_dim)) ** 0.5
    attention_param = std * jax.random.normal(k_att, (emb_dim, emb_dim),
                                              jnp.float32)
    return {"emb_weight": emb_weight, "attention_param": attention_param}


def encode(params, nh):
    # nn.Embedding lookup (plain-JAX glue). torch output is (B, D, L); we keep
    # (B, L, D).  Dropout = identity (eval mode).
    return params["emb_weight"][nh]


# ---------------------------------------------------------------------------
# GAP forward
# ---------------------------------------------------------------------------
@functools.partial(jax.jit, static_argnames=("emb_dtype",))
def gap_forward(params, source_nh, target_nh, source_mask, target_mask,
                negative_nh=None, negative_mask=None, emb_dtype=jnp.float32):
    src_emb = encode(params, source_nh)      # (B, Ls, D)
    tgt_emb = encode(params, target_nh)      # (B, Lt, D)
    A = params["attention_param"]

    if negative_nh is not None:
        neg_emb = encode(params, negative_nh)    # (B, Ln, D)
        source_rep, target_rep, negative_rep = gap_attention_pool(
            src_emb, tgt_emb, A, source_mask, target_mask,
            neg_emb, negative_mask, emb_dtype=emb_dtype)
        return {"source_rep": source_rep, "target_rep": target_rep,
                "negative_rep": negative_rep}

    source_rep, target_rep = gap_attention_pool(
        src_emb, tgt_emb, A, source_mask, target_mask, emb_dtype=emb_dtype)
    return {"source_rep": source_rep, "target_rep": target_rep}


# ---------------------------------------------------------------------------
# Pure-JAX reference (mirrors the torch math exactly) for sanity checks
# ---------------------------------------------------------------------------
def gap_reference(params, source_nh, target_nh, source_mask, target_mask,
                  negative_nh, negative_mask):
    A = params["attention_param"]
    # torch layout: (B, D, L)
    src = jnp.swapaxes(encode(params, source_nh), 1, 2)
    tgt = jnp.swapaxes(encode(params, target_nh), 1, 2)
    sim = jnp.tanh(jnp.einsum("bds,de,bet->bst", src, A, tgt))
    s_vec = jnp.mean(sim, axis=-1, keepdims=True) + source_mask[..., None]
    s_att = jax.nn.softmax(s_vec, axis=1)
    t_vec = (jnp.swapaxes(jnp.mean(sim, axis=1, keepdims=True), 1, 2)
             + target_mask[..., None])
    t_att = jax.nn.softmax(t_vec, axis=1)
    source_rep = jnp.einsum("bds,bso->bd", src, s_att)
    target_rep = jnp.einsum("bdt,bto->bd", tgt, t_att)

    neg = jnp.swapaxes(encode(params, negative_nh), 1, 2)
    nsim = jnp.tanh(jnp.einsum("bds,de,ben->bsn", src, A, neg))
    n_vec = (jnp.swapaxes(jnp.mean(nsim, axis=1, keepdims=True), 1, 2)
             + negative_mask[..., None])
    n_att = jax.nn.softmax(n_vec, axis=1)
    negative_rep = jnp.einsum("bdn,bno->bd", neg, n_att)
    return source_rep, target_rep, negative_rep


# ---------------------------------------------------------------------------
if __name__ == "__main__":
    num_nodes = 16
    emb_dim = 32
    Ls = Lt = Ln = 8

    key = jax.random.PRNGKey(0)
    k_par = jax.random.fold_in(key, 0)
    params = init_gap_params(k_par, num_nodes, emb_dim)

    def make_inputs(B, tag):
        kk = jax.random.fold_in(key, tag)
        k_s, k_t, k_n, k_ms, k_mt, k_mn = jax.random.split(kk, 6)
        src = jax.random.randint(k_s, (B, Ls), 0, num_nodes + 1, jnp.int32)
        tgt = jax.random.randint(k_t, (B, Lt), 0, num_nodes + 1, jnp.int32)
        neg = jax.random.randint(k_n, (B, Ln), 0, num_nodes + 1, jnp.int32)

        def make_mask(k, L):
            keep = jax.random.bernoulli(k, 0.75, (B, L))
            return jnp.where(keep, 0.0, -1e9).astype(jnp.float32)

        return (src, tgt, neg,
                make_mask(k_ms, Ls), make_mask(k_mt, Lt), make_mask(k_mn, Ln))

    # --- small batch (matches the torch usage pattern: B=2, L=8, D=32) -----
    s_nh, t_nh, n_nh, s_m, t_m, n_m = make_inputs(2, tag=1)
    out = gap_forward(params, s_nh, t_nh, s_m, t_m, n_nh, n_m)
    jax.block_until_ready(out)
    ref_s, ref_t, ref_n = gap_reference(params, s_nh, t_nh, s_m, t_m, n_nh, n_m)
    assert jnp.allclose(out["source_rep"], ref_s, atol=2e-3, rtol=2e-3)
    assert jnp.allclose(out["target_rep"], ref_t, atol=2e-3, rtol=2e-3)
    assert jnp.allclose(out["negative_rep"], ref_n, atol=2e-3, rtol=2e-3)

    # --- larger batch (exercises multi-step grid, batch padding, Bt=8) -----
    s_nh, t_nh, n_nh, s_m, t_m, n_m = make_inputs(20, tag=2)
    out = gap_forward(params, s_nh, t_nh, s_m, t_m, n_nh, n_m)
    jax.block_until_ready(out)
    ref_s, ref_t, ref_n = gap_reference(params, s_nh, t_nh, s_m, t_m, n_nh, n_m)
    assert jnp.allclose(out["source_rep"], ref_s, atol=2e-3, rtol=2e-3)
    assert jnp.allclose(out["target_rep"], ref_t, atol=2e-3, rtol=2e-3)
    assert jnp.allclose(out["negative_rep"], ref_n, atol=2e-3, rtol=2e-3)

    # --- bf16 embedding inputs (narrow MXU / halved DMA path), loose tol ---
    out_bf16 = gap_forward(params, s_nh, t_nh, s_m, t_m, n_nh, n_m,
                           emb_dtype=jnp.bfloat16)
    jax.block_until_ready(out_bf16)
    assert jnp.allclose(out_bf16["source_rep"], ref_s, atol=5e-2, rtol=5e-2)
    assert jnp.allclose(out_bf16["target_rep"], ref_t, atol=5e-2, rtol=5e-2)
    assert jnp.allclose(out_bf16["negative_rep"], ref_n, atol=5e-2, rtol=5e-2)

    # --- pair-only path (no negative branch) --------------------------------
    out_pair = gap_forward(params, s_nh, t_nh, s_m, t_m)
    jax.block_until_ready(out_pair)
    assert jnp.allclose(out_pair["source_rep"], ref_s, atol=2e-3, rtol=2e-3)
    assert jnp.allclose(out_pair["target_rep"], ref_t, atol=2e-3, rtol=2e-3)

    print("KERNEL_OK")
</pallas_src>

<mosaic_0001>
module attributes {stable_mosaic.version = 11 : i64} {
  func.func @gap_fused_kernel(%arg0: i32, %arg1: memref<2x8x32xf32, #tpu.memory_space<vmem>>, %arg2: memref<2x8x32xf32, #tpu.memory_space<vmem>>, %arg3: memref<2x8x32xf32, #tpu.memory_space<vmem>>, %arg4: memref<32x32xf32, #tpu.memory_space<vmem>>, %arg5: memref<2x8xf32, #tpu.memory_space<vmem>>, %arg6: memref<2x8xf32, #tpu.memory_space<vmem>>, %arg7: memref<2x8xf32, #tpu.memory_space<vmem>>, %arg8: memref<2x32xf32, #tpu.memory_space<vmem>>, %arg9: memref<2x32xf32, #tpu.memory_space<vmem>>, %arg10: memref<2x32xf32, #tpu.memory_space<vmem>>) attributes {dimension_semantics = [#tpu.dimension_semantics<parallel>], iteration_bounds = array<i64: 1>, scalar_prefetch = 0 : i64, scratch_operands = 0 : i64, tpu.core_type = #tpu.core_type<tc>, window_params = [{transform_indices = @transform_0, window_bounds = array<i64: 2, 8, 32>}, {transform_indices = @transform_1, window_bounds = array<i64: 2, 8, 32>}, {transform_indices = @transform_2, window_bounds = array<i64: 2, 8, 32>}, {pipeline_mode = #tpu.pipeline_mode<synchronous>, transform_indices = @transform_3, window_bounds = array<i64: 32, 32>}, {transform_indices = @transform_4, window_bounds = array<i64: 2, 8>}, {transform_indices = @transform_5, window_bounds = array<i64: 2, 8>}, {transform_indices = @transform_6, window_bounds = array<i64: 2, 8>}, {transform_indices = @transform_7, window_bounds = array<i64: 2, 32>}, {transform_indices = @transform_8, window_bounds = array<i64: 2, 32>}, {transform_indices = @transform_9, window_bounds = array<i64: 2, 32>}]} {
    %c0 = arith.constant 0 : index
    %c0_0 = arith.constant 0 : index
    %c0_1 = arith.constant 0 : index
    %0 = vector.load %arg1[%c0, %c0_0, %c0_1] : memref<2x8x32xf32, #tpu.memory_space<vmem>>, vector<2x8x32xf32>
    %c0_2 = arith.constant 0 : index
    %c0_3 = arith.constant 0 : index
    %c0_4 = arith.constant 0 : index
    %1 = vector.load %arg2[%c0_2, %c0_3, %c0_4] : memref<2x8x32xf32, #tpu.memory_space<vmem>>, vector<2x8x32xf32>
    %c0_5 = arith.constant 0 : index
    %c0_6 = arith.constant 0 : index
    %c0_7 = arith.constant 0 : index
    %2 = vector.load %arg3[%c0_5, %c0_6, %c0_7] : memref<2x8x32xf32, #tpu.memory_space<vmem>>, vector<2x8x32xf32>
    %c0_8 = arith.constant 0 : index
    %c0_9 = arith.constant 0 : index
    %3 = vector.load %arg4[%c0_8, %c0_9] : memref<32x32xf32, #tpu.memory_space<vmem>>, vector<32x32xf32>
    %4 = vector.shape_cast %0 : vector<2x8x32xf32> to vector<16x32xf32>
    %cst = arith.constant dense<0.000000e+00> : vector<16x32xf32>
    %5 = tpu.matmul %4, %3, %cst {dimension_numbers = #tpu.dot_dimension_numbers<[1], [0], [0], [1], [0, 0, 1, 1], [], []>} : vector<16x32xf32>, vector<32x32xf32>, vector<16x32xf32> -> vector<16x32xf32>
    %6 = vector.shape_cast %5 : vector<16x32xf32> to vector<2x8x32xf32>
    "tpu.trace_start"() <{level = 10 : i32, message = "bqd,bkd->bqk"}> : () -> ()
    %cst_10 = arith.constant dense<0.000000e+00> : vector<2x8x8xf32>
    %7 = tpu.matmul %6, %1, %cst_10 {dimension_numbers = #tpu.dot_dimension_numbers<[2], [2], [1], [1], [0, 0, 0, 1, 1, 1], [0], [0]>} : vector<2x8x32xf32>, vector<2x8x32xf32>, vector<2x8x8xf32> -> vector<2x8x8xf32>
    "tpu.trace_stop"() : () -> ()
    %8 = math.tanh %7 : vector<2x8x8xf32>
    "tpu.trace_start"() <{level = 10 : i32, message = "bqd,bkd->bqk"}> : () -> ()
    %cst_11 = arith.constant dense<0.000000e+00> : vector<2x8x8xf32>
    %9 = tpu.matmul %6, %2, %cst_11 {dimension_numbers = #tpu.dot_dimension_numbers<[2], [2], [1], [1], [0, 0, 0, 1, 1, 1], [0], [0]>} : vector<2x8x32xf32>, vector<2x8x32xf32>, vector<2x8x8xf32> -> vector<2x8x8xf32>
    "tpu.trace_stop"() : () -> ()
    %10 = math.tanh %9 : vector<2x8x8xf32>
    %cst_12 = arith.constant dense<0.000000e+00> : vector<2x8xf32>
    %11 = vector.multi_reduction <add>, %8, %cst_12 [2] : vector<2x8x8xf32> to vector<2x8xf32>
    %cst_13 = arith.constant 8.000000e+00 : f32
    %12 = vector.broadcast %cst_13 : f32 to vector<2x8xf32>
    %13 = arith.divf %11, %12 : vector<2x8xf32>
    %c0_14 = arith.constant 0 : index
    %c0_15 = arith.constant 0 : index
    %14 = vector.load %arg5[%c0_14, %c0_15] : memref<2x8xf32, #tpu.memory_space<vmem>>, vector<2x8xf32>
    %15 = arith.addf %13, %14 : vector<2x8xf32>
    %cst_16 = arith.constant dense<0xFF800000> : vector<2xf32>
    %16 = vector.multi_reduction <maximumf>, %15, %cst_16 [1] : vector<2x8xf32> to vector<2xf32>
    %17 = vector.shape_cast %16 : vector<2xf32> to vector<2x1xf32>
    %18 = vector.broadcast %17 : vector<2x1xf32> to vector<2x8xf32>
    %19 = arith.subf %15, %18 : vector<2x8xf32>
    %20 = math.exp %19 : vector<2x8xf32>
    %cst_17 = arith.constant dense<0.000000e+00> : vector<2xf32>
    %21 = vector.multi_reduction <add>, %20, %cst_17 [1] : vector<2x8xf32> to vector<2xf32>
    %22 = vector.shape_cast %21 : vector<2xf32> to vector<2x1xf32>
    %23 = tpu.reciprocal %22 {approx = true} : vector<2x1xf32> -> vector<2x1xf32>
    %24 = vector.broadcast %23 : vector<2x1xf32> to vector<2x8xf32>
    %25 = arith.mulf %20, %24 : vector<2x8xf32>
    %cst_18 = arith.constant dense<0.000000e+00> : vector<2x8xf32>
    %26 = vector.multi_reduction <add>, %8, %cst_18 [1] : vector<2x8x8xf32> to vector<2x8xf32>
    %cst_19 = arith.constant 8.000000e+00 : f32
    %27 = vector.broadcast %cst_19 : f32 to vector<2x8xf32>
    %28 = arith.divf %26, %27 : vector<2x8xf32>
    %c0_20 = arith.constant 0 : index
    %c0_21 = arith.constant 0 : index
    %29 = vector.load %arg6[%c0_20, %c0_21] : memref<2x8xf32, #tpu.memory_space<vmem>>, vector<2x8xf32>
    %30 = arith.addf %28, %29 : vector<2x8xf32>
    %cst_22 = arith.constant dense<0xFF800000> : vector<2xf32>
    %31 = vector.multi_reduction <maximumf>, %30, %cst_22 [1] : vector<2x8xf32> to vector<2xf32>
    %32 = vector.shape_cast %31 : vector<2xf32> to vector<2x1xf32>
    %33 = vector.broadcast %32 : vector<2x1xf32> to vector<2x8xf32>
    %34 = arith.subf %30, %33 : vector<2x8xf32>
    %35 = math.exp %34 : vector<2x8xf32>
    %cst_23 = arith.constant dense<0.000000e+00> : vector<2xf32>
    %36 = vector.multi_reduction <add>, %35, %cst_23 [1] : vector<2x8xf32> to vector<2xf32>
    %37 = vector.shape_cast %36 : vector<2xf32> to vector<2x1xf32>
    %38 = tpu.reciprocal %37 {approx = true} : vector<2x1xf32> -> vector<2x1xf32>
    %39 = vector.broadcast %38 : vector<2x1xf32> to vector<2x8xf32>
    %40 = arith.mulf %35, %39 : vector<2x8xf32>
    %cst_24 = arith.constant dense<0.000000e+00> : vector<2x8xf32>
    %41 = vector.multi_reduction <add>, %10, %cst_24 [1] : vector<2x8x8xf32> to vector<2x8xf32>
    %cst_25 = arith.constant 8.000000e+00 : f32
    %42 = vector.broadcast %cst_25 : f32 to vector<2x8xf32>
    %43 = arith.divf %41, %42 : vector<2x8xf32>
    %c0_26 = arith.constant 0 : index
    %c0_27 = arith.constant 0 : index
    %44 = vector.load %arg7[%c0_26, %c0_27] : memref<2x8xf32, #tpu.memory_space<vmem>>, vector<2x8xf32>
    %45 = arith.addf %43, %44 : vector<2x8xf32>
    %cst_28 = arith.constant dense<0xFF800000> : vector<2xf32>
    %46 = vector.multi_reduction <maximumf>, %45, %cst_28 [1] : vector<2x8xf32> to vector<2xf32>
    %47 = vector.shape_cast %46 : vector<2xf32> to vector<2x1xf32>
    %48 = vector.broadcast %47 : vector<2x1xf32> to vector<2x8xf32>
    %49 = arith.subf %45, %48 : vector<2x8xf32>
    %50 = math.exp %49 : vector<2x8xf32>
    %cst_29 = arith.constant dense<0.000000e+00> : vector<2xf32>
    %51 = vector.multi_reduction <add>, %50, %cst_29 [1] : vector<2x8xf32> to vector<2xf32>
    %52 = vector.shape_cast %51 : vector<2xf32> to vector<2x1xf32>
    %53 = tpu.reciprocal %52 {approx = true} : vector<2x1xf32> -> vector<2x1xf32>
    %54 = vector.broadcast %53 : vector<2x1xf32> to vector<2x8xf32>
    %55 = arith.mulf %50, %54 : vector<2x8xf32>
    %56 = vector.shape_cast %25 : vector<2x8xf32> to vector<2x8x1xf32>
    %57 = vector.broadcast %56 : vector<2x8x1xf32> to vector<2x8x32xf32>
    %58 = arith.mulf %57, %0 : vector<2x8x32xf32>
    %cst_30 = arith.constant dense<0.000000e+00> : vector<2x32xf32>
    %59 = vector.multi_reduction <add>, %58, %cst_30 [1] : vector<2x8x32xf32> to vector<2x32xf32>
    %c0_31 = arith.constant 0 : index
    %c0_32 = arith.constant 0 : index
    %60 = vector.load %arg8[%c0_31, %c0_32] : memref<2x32xf32, #tpu.memory_space<vmem>>, vector<2x32xf32>
    tpu.vector_store %arg8[%c0_31, %c0_32], %59 {strides = array<i32>} : memref<2x32xf32, #tpu.memory_space<vmem>>, vector<2x32xf32>,
    %61 = vector.shape_cast %40 : vector<2x8xf32> to vector<2x8x1xf32>
    %62 = vector.broadcast %61 : vector<2x8x1xf32> to vector<2x8x32xf32>
    %63 = arith.mulf %62, %1 : vector<2x8x32xf32>
    %cst_33 = arith.constant dense<0.000000e+00> : vector<2x32xf32>
    %64 = vector.multi_reduction <add>, %63, %cst_33 [1] : vector<2x8x32xf32> to vector<2x32xf32>
    %c0_34 = arith.constant 0 : index
    %c0_35 = arith.constant 0 : index
    %65 = vector.load %arg9[%c0_34, %c0_35] : memref<2x32xf32, #tpu.memory_space<vmem>>, vector<2x32xf32>
    tpu.vector_store %arg9[%c0_34, %c0_35], %64 {strides = array<i32>} : memref<2x32xf32, #tpu.memory_space<vmem>>, vector<2x32xf32>,
    %66 = vector.shape_cast %55 : vector<2x8xf32> to vector<2x8x1xf32>
    %67 = vector.broadcast %66 : vector<2x8x1xf32> to vector<2x8x32xf32>
    %68 = arith.mulf %67, %2 : vector<2x8x32xf32>
    %cst_36 = arith.constant dense<0.000000e+00> : vector<2x32xf32>
    %69 = vector.multi_reduction <add>, %68, %cst_36 [1] : vector<2x8x32xf32> to vector<2x32xf32>
    %c0_37 = arith.constant 0 : index
    %c0_38 = arith.constant 0 : index
    %70 = vector.load %arg10[%c0_37, %c0_38] : memref<2x32xf32, #tpu.memory_space<vmem>>, vector<2x32xf32>
    tpu.vector_store %arg10[%c0_37, %c0_38], %69 {strides = array<i32>} : memref<2x32xf32, #tpu.memory_space<vmem>>, vector<2x32xf32>,
    return
  }
  func.func @transform_0(%arg0: i32) -> (i32, i32, i32) {
    %c0_i32 = arith.constant 0 : i32
    %c0_i32_0 = arith.constant 0 : i32
    %c0_i32_1 = arith.constant 0 : i32
    return %arg0, %c0_i32, %c0_i32_0 : i32, i32, i32
  }
  func.func @transform_1(%arg0: i32) -> (i32, i32, i32) {
    %c0_i32 = arith.constant 0 : i32
    %c0_i32_0 = arith.constant 0 : i32
    %c0_i32_1 = arith.constant 0 : i32
    return %arg0, %c0_i32, %c0_i32_0 : i32, i32, i32
  }
  func.func @transform_2(%arg0: i32) -> (i32, i32, i32) {
    %c0_i32 = arith.constant 0 : i32
    %c0_i32_0 = arith.constant 0 : i32
    %c0_i32_1 = arith.constant 0 : i32
    return %arg0, %c0_i32, %c0_i32_0 : i32, i32, i32
  }
  func.func @transform_3(%arg0: i32) -> (i32, i32) {
    %c0_i32 = arith.constant 0 : i32
    %c0_i32_0 = arith.constant 0 : i32
    %c0_i32_1 = arith.constant 0 : i32
    return %c0_i32, %c0_i32_0 : i32, i32
  }
  func.func @transform_4(%arg0: i32) -> (i32, i32) {
    %c0_i32 = arith.constant 0 : i32
    %c0_i32_0 = arith.constant 0 : i32
    return %arg0, %c0_i32 : i32, i32
  }
  func.func @transform_5(%arg0: i32) -> (i32, i32) {
    %c0_i32 = arith.constant 0 : i32
    %c0_i32_0 = arith.constant 0 : i32
    return %arg0, %c0_i32 : i32, i32
  }
  func.func @transform_6(%arg0: i32) -> (i32, i32) {
    %c0_i32 = arith.constant 0 : i32
    %c0_i32_0 = arith.constant 0 : i32
    return %arg0, %c0_i32 : i32, i32
  }
  func.func @transform_7(%arg0: i32) -> (i32, i32) {
    %c0_i32 = arith.constant 0 : i32
    %c0_i32_0 = arith.constant 0 : i32
    return %arg0, %c0_i32 : i32, i32
  }
  func.func @transform_8(%arg0: i32) -> (i32, i32) {
    %c0_i32 = arith.constant 0 : i32
    %c0_i32_0 = arith.constant 0 : i32
    return %arg0, %c0_i32 : i32, i32
  }
  func.func @transform_9(%arg0: i32) -> (i32, i32) {
    %c0_i32 = arith.constant 0 : i32
    %c0_i32_0 = arith.constant 0 : i32
    return %arg0, %c0_i32 : i32, i32
  }
}

</mosaic_0001>

<llo_original>
// kernel: gap_forward.1
$region0: #{gap_forward.1}
  #allocation0 [shape = 'u32[]', space=smem, size = 0x4, offset = 0x4, fixed_abs, tag = 'smem constant byte address 0x4 - core index']
  #allocation1 [shape = 'u32[144,128]{1,0:T(1,128)}', space=vmem, size = 0x12000, scoped, tag = 'internal scratch']
  %s0 = inlined_call_operand.vmem [shape: f32[2,8,32], index: 0, kind: input, shape index: {}]
  %s1 = inlined_call_operand.vmem [shape: f32[2,8,32], index: 1, kind: input, shape index: {}]
  %s2 = inlined_call_operand.vmem [shape: f32[2,8,32], index: 2, kind: input, shape index: {}]
  %s3 = inlined_call_operand.vmem [shape: f32[32,32], index: 3, kind: input, shape index: {}]
  %s4 = inlined_call_operand.vmem [shape: f32[2,8], index: 4, kind: input, shape index: {}]
  %s5 = inlined_call_operand.vmem [shape: f32[2,8], index: 5, kind: input, shape index: {}]
  %s6 = inlined_call_operand.vmem [shape: f32[2,8], index: 6, kind: input, shape index: {}]
  %s7 = inlined_call_operand.hbm [shape: f32[2,32], index: 7, kind: output, shape index: {0}]
  %s8 = inlined_call_operand.hbm [shape: f32[2,32], index: 8, kind: output, shape index: {1}]
  %s9 = inlined_call_operand.hbm [shape: f32[2,32], index: 9, kind: output, shape index: {2}]
  %10 = xla_tuple %s7, %s8, %s9
  %s11 = sld [smem:[#allocation0]]
  $region54: #{gap_forward.1} parent=0
    _
  %s13 = ssub.s32 1, %s11
  %s14 = scalar_select 0, %s13, %s11
  $region1: #{gap_forward.1} parent=0
    #allocation2 [shape = 'u8[1024]{0}', space=vmem, size = 0x400, scoped, tag = 'output window, operand 0, single buffered']
    #allocation3 [shape = 's32[1]{0}', space=sflag, size = 0x4, scoped, tag = 'scoped memory for gap_forward.1']
    #allocation4 [shape = 'u8[1024]{0}', space=vmem, size = 0x400, scoped, tag = 'output window, operand 1, single buffered']
    #allocation5 [shape = 's32[1]{0}', space=sflag, size = 0x4, scoped, tag = 'scoped memory for gap_forward.1']
    #allocation6 [shape = 'u8[1024]{0}', space=vmem, size = 0x400, scoped, tag = 'output window, operand 2, single buffered']
    %15 = vsyncpa [#allocation3], 0
    %16 = vsyncpa [#allocation5], 0
    // Predicated region
    $region2: #{gap_forward.1} parent=1 // pred_check
      _
    $region3: #{gap_forward.1} parent=1 // pred_check_branch
      %18 = sbr.rel (0) target = $region5
    $region4: #{gap_forward.1} parent=1 // pred_region
      _
    $region5: #{gap_forward.1} parent=1 // pred_fallthru
      _
    // Predicated region
    $region6: #{gap_forward.1} parent=1 // pred_check
      _
    $region7: #{gap_forward.1} parent=1 // pred_check_branch
      %20 = sbr.rel (0) target = $region9
    $region8: #{gap_forward.1} parent=1 // pred_region
      _
    $region9: #{gap_forward.1} parent=1 // pred_fallthru
      _
    // Predicated region
    $region10: #{gap_forward.1} parent=1 // pred_check
      _
    $region11: #{gap_forward.1} parent=1 // pred_check_branch
      %22 = sbr.rel (0) target = $region13
    $region12: #{gap_forward.1} parent=1 // pred_region
      _
    $region13: #{gap_forward.1} parent=1 // pred_fallthru
      _
    // Predicated region
    $region14: #{gap_forward.1} parent=1 // pred_check
      _
    $region15: #{gap_forward.1} parent=1 // pred_check_branch
      %24 = sbr.rel (0) target = $region17
    $region16: #{gap_forward.1} parent=1 // pred_region
      _
    $region17: #{gap_forward.1} parent=1 // pred_fallthru
      _
    // Predicated region
    $region18: #{gap_forward.1} parent=1 // pred_check
      _
    $region19: #{gap_forward.1} parent=1 // pred_check_branch
      %26 = sbr.rel (0) target = $region21
    $region20: #{gap_forward.1} parent=1 // pred_region
      _
    $region21: #{gap_forward.1} parent=1 // pred_fallthru
      _
    // Predicated region
    $region22: #{gap_forward.1} parent=1 // pred_check
      _
    $region23: #{gap_forward.1} parent=1 // pred_check_branch
      %28 = sbr.rel (0) target = $region25
    $region24: #{gap_forward.1} parent=1 // pred_region
      _
    $region25: #{gap_forward.1} parent=1 // pred_fallthru
      _
    // Predicated region
    $region26: #{gap_forward.1} parent=1 // pred_check
      _
    $region27: #{gap_forward.1} parent=1 // pred_check_branch
      %30 = sbr.rel (0) target = $region29
    $region28: #{gap_forward.1} parent=1 // pred_region
      _
    $region29: #{gap_forward.1} parent=1 // pred_fallthru
      _
    %v31 = vld [vmem:[%s0] sm:$0xff]
    %v32 = vld [vmem:[%s0 + $0x8] sm:$0xff]
    %v33 = vld [vmem:[%s1] sm:$0xff]
    %v34 = vld [vmem:[%s1 + $0x8] sm:$0xff]
    %v35 = vld [vmem:[%s2] sm:$0xff]
    %v36 = vld [vmem:[%s2 + $0x8] sm:$0xff]
    %v37 = vld [vmem:[%s3] sm:$0xff]
    %v38 = vld [vmem:[%s3 + $0x8] sm:$0xff]
    %v39 = vld [vmem:[%s3 + $0x10] sm:$0xff]
    %v40 = vld [vmem:[%s3 + $0x18] sm:$0xff]
    %vm41 = vcmask 261120
    %v43 = vsel %vm41, %v31, 0
    %v46 = vsel %vm41, %v32, 0
    %48 = vmatprep.subr.mxu0 0.0
    %49 = vmatpush1.msra.mxu0 %v37
    %50 = vmatprep.subr.mxu0 0.0
    %51 = vmatpush1.msra.mxu0 %v38
    %52 = vmatprep.subr.mxu0 0.0
    %53 = vmatpush1.msra.mxu0 %v39
    %54 = vmatprep.subr.mxu0 0.0
    %55 = vmatpush1.msra.mxu0 %v40
    %56 = vmatprep.subr.mxu0 0.0
    %57 = vmatpush1.msra.mxu0 0.0
    %58 = vmatprep.subr.mxu0 0.0
    %59 = vmatpush1.msra.mxu0 0.0
    %60 = vmatprep.subr.mxu0 0.0
    %61 = vmatpush1.msra.mxu0 0.0
    %62 = vmatprep.subr.mxu0 0.0
    %63 = vmatpush1.msra.mxu0 0.0
    %64 = vmatprep.subr.mxu0 0.0
    %65 = vmatpush1.msra.mxu0 0.0
    %66 = vmatprep.subr.mxu0 0.0
    %67 = vmatpush1.msra.mxu0 0.0
    %68 = vmatprep.subr.mxu0 0.0
    %69 = vmatpush1.msra.mxu0 0.0
    %70 = vmatprep.subr.mxu0 0.0
    %71 = vmatpush1.msra.mxu0 0.0
    %72 = vmatprep.subr.mxu0 0.0
    %73 = vmatpush1.msra.mxu0 0.0
    %74 = vmatprep.subr.mxu0 0.0
    %75 = vmatpush1.msra.mxu0 0.0
    %76 = vmatprep.subr.mxu0 0.0
    %77 = vmatpush1.msra.mxu0 0.0
    %78 = vmatprep.subr.mxu0 0.0
    %79 = vmatpush1.msra.mxu0 0.0
    %80 = vmatprep.subr.mxu0 0.0
    %81 = vmatpush1.msra.mxu0 0.0
    %82 = vmatprep.subr.mxu0 0.0
    %83 = vmatpush1.msra.mxu0 0.0
    %84 = vmatprep.subr.mxu0 0.0
    %85 = vmatpush1.msra.mxu0 0.0
    %86 = vmatprep.subr.mxu0 0.0
    %87 = vmatpush1.msra.mxu0 0.0
    %88 = vmatprep.subr.mxu0 0.0
    %89 = vmatpush1.msra.mxu0 0.0
    %90 = vmatprep.subr.mxu0 0.0
    %91 = vmatpush1.msra.mxu0 0.0
    %92 = vmatprep.subr.mxu0 0.0
    %93 = vmatpush1.msra.mxu0 0.0
    %94 = vmatprep.subr.mxu0 0.0
    %95 = vmatpush1.msra.mxu0 0.0
    %96 = vmatprep.subr.mxu0 0.0
    %97 = vmatpush1.msra.mxu0 0.0
    %98 = vmatprep.subr.mxu0 0.0
    %99 = vmatpush1.msra.mxu0 0.0
    %100 = vmatprep.subr.mxu0 0.0
    %101 = vmatpush1.msra.mxu0 0.0
    %102 = vmatprep.subr.mxu0 0.0
    %103 = vmatpush1.msra.mxu0 0.0
    %104 = vmatprep.subr.mxu0 0.0
    %105 = vmatpush1.msra.mxu0 0.0
    %106 = vmatprep.subr.mxu0 0.0
    %107 = vmatpush1.msra.mxu0 0.0
    %108 = vmatprep.subr.mxu0 0.0
    %109 = vmatpush1.msra.mxu0 0.0
    %110 = vmatprep.subr.mxu0 0.0
    %111 = vmatpush1.msra.mxu0 0.0
    %112 = vmatprep.mubr.f32.mxu0 0.0
    %113 = vmatmul.mubr.f32.gmra.mrb[0].mxu0 %v43
    %v114 = vpop.f32.mrb[0].mxu0
    %v115 = vadd.f32 0.0, %v114
    %v116 = vpop.f32.mrb[0].mxu0
    %117 = vmatprep.mubr.f32.mxu0 0.0
    %118 = vmatmul.mubr.f32.gmra.mrb[0].mxu0 %v46
    %v119 = vpop.f32.mrb[0].mxu0
    %v120 = vadd.f32 0.0, %v119
    %v121 = vpop.f32.mrb[0].mxu0
    %122 = vdwg.mxu0
    %v124 = vsel %vm41, %v115, 0
    %v127 = vsel %vm41, %v33, 0
    %129 = vmatprep.subr.mxu0 0.0
    %130 = vmatpush1.xpose.msra.mxu0 %v127
    %131 = vmatprep.subr.mxu0 0.0
    %132 = vmatpush1.xpose.msra.mxu0 0.0
    %133 = vmatprep.subr.mxu0 0.0
    %134 = vmatpush1.xpose.msra.mxu0 0.0
    %135 = vmatprep.subr.mxu0 0.0
    %136 = vmatpush1.xpose.msra.mxu0 0.0
    %137 = vmatprep.subr.mxu0 0.0
    %138 = vmatpush1.xpose.msra.mxu0 0.0
    %139 = vmatprep.subr.mxu0 0.0
    %140 = vmatpush1.xpose.msra.mxu0 0.0
    %141 = vmatprep.subr.mxu0 0.0
    %142 = vmatpush1.xpose.msra.mxu0 0.0
    %143 = vmatprep.subr.mxu0 0.0
    %144 = vmatpush1.xpose.msra.mxu0 0.0
    %145 = vmatprep.subr.mxu0 0.0
    %146 = vmatpush1.xpose.msra.mxu0 0.0
    %147 = vmatprep.subr.mxu0 0.0
    %148 = vmatpush1.xpose.msra.mxu0 0.0
    %149 = vmatprep.subr.mxu0 0.0
    %150 = vmatpush1.xpose.msra.mxu0 0.0
    %151 = vmatprep.subr.mxu0 0.0
    %152 = vmatpush1.xpose.msra.mxu0 0.0
    %153 = vmatprep.subr.mxu0 0.0
    %154 = vmatpush1.xpose.msra.mxu0 0.0
    %155 = vmatprep.subr.mxu0 0.0
    %156 = vmatpush1.xpose.msra.mxu0 0.0
    %157 = vmatprep.subr.mxu0 0.0
    %158 = vmatpush1.xpose.msra.mxu0 0.0
    %159 = vmatprep.subr.mxu0 0.0
    %160 = vmatpush1.xpose.msra.mxu0 0.0
    %161 = vmatprep.subr.mxu0 0.0
    %162 = vmatpush1.xpose.msra.mxu0 0.0
    %163 = vmatprep.subr.mxu0 0.0
    %164 = vmatpush1.xpose.msra.mxu0 0.0
    %165 = vmatprep.subr.mxu0 0.0
    %166 = vmatpush1.xpose.msra.mxu0 0.0
    %167 = vmatprep.subr.mxu0 0.0
    %168 = vmatpush1.xpose.msra.mxu0 0.0
    %169 = vmatprep.subr.mxu0 0.0
    %170 = vmatpush1.xpose.msra.mxu0 0.0
    %171 = vmatprep.subr.mxu0 0.0
    %172 = vmatpush1.xpose.msra.mxu0 0.0
    %173 = vmatprep.subr.mxu0 0.0
    %174 = vmatpush1.xpose.msra.mxu0 0.0
    %175 = vmatprep.subr.mxu0 0.0
    %176 = vmatpush1.xpose.msra.mxu0 0.0
    %177 = vmatprep.subr.mxu0 0.0
    %178 = vmatpush1.xpose.msra.mxu0 0.0
    %179 = vmatprep.subr.mxu0 0.0
    %180 = vmatpush1.xpose.msra.mxu0 0.0
    %181 = vmatprep.subr.mxu0 0.0
    %182 = vmatpush1.xpose.msra.mxu0 0.0
    %183 = vmatprep.subr.mxu0 0.0
    %184 = vmatpush1.xpose.msra.mxu0 0.0
    %185 = vmatprep.subr.mxu0 0.0
    %186 = vmatpush1.xpose.msra.mxu0 0.0
    %187 = vmatprep.subr.mxu0 0.0
    %188 = vmatpush1.xpose.msra.mxu0 0.0
    %189 = vmatprep.subr.mxu0 0.0
    %190 = vmatpush1.xpose.msra.mxu0 0.0
    %191 = vmatprep.subr.mxu0 0.0
    %192 = vmatpush1.xpose.msra.mxu0 0.0
    %193 = vmatprep.mubr.f32.mxu0 0.0
    %194 = vmatmul.mubr.f32.gmra.mrb[0].mxu0 %v124
    %v195 = vpop.f32.mrb[0].mxu0
    %v196 = vadd.f32 0.0, %v195
    %v197 = vpop.f32.mrb[0].mxu0
    %198 = vdwg.mxu0
    %v200 = vsel %vm41, %v120, 0
    %v203 = vsel %vm41, %v34, 0
    %205 = vmatprep.subr.mxu0 0.0
    %206 = vmatpush1.xpose.msra.mxu0 %v203
    %207 = vmatprep.subr.mxu0 0.0
    %208 = vmatpush1.xpose.msra.mxu0 0.0
    %209 = vmatprep.subr.mxu0 0.0
    %210 = vmatpush1.xpose.msra.mxu0 0.0
    %211 = vmatprep.subr.mxu0 0.0
    %212 = vmatpush1.xpose.msra.mxu0 0.0
    %213 = vmatprep.subr.mxu0 0.0
    %214 = vmatpush1.xpose.msra.mxu0 0.0
    %215 = vmatprep.subr.mxu0 0.0
    %216 = vmatpush1.xpose.msra.mxu0 0.0
    %217 = vmatprep.subr.mxu0 0.0
    %218 = vmatpush1.xpose.msra.mxu0 0.0
    %219 = vmatprep.subr.mxu0 0.0
    %220 = vmatpush1.xpose.msra.mxu0 0.0
    %221 = vmatprep.subr.mxu0 0.0
    %222 = vmatpush1.xpose.msra.mxu0 0.0
    %223 = vmatprep.subr.mxu0 0.0
    %224 = vmatpush1.xpose.msra.mxu0 0.0
    %225 = vmatprep.subr.mxu0 0.0
    %226 = vmatpush1.xpose.msra.mxu0 0.0
    %227 = vmatprep.subr.mxu0 0.0
    %228 = vmatpush1.xpose.msra.mxu0 0.0
    %229 = vmatprep.subr.mxu0 0.0
    %230 = vmatpush1.xpose.msra.mxu0 0.0
    %231 = vmatprep.subr.mxu0 0.0
    %232 = vmatpush1.xpose.msra.mxu0 0.0
    %233 = vmatprep.subr.mxu0 0.0
    %234 = vmatpush1.xpose.msra.mxu0 0.0
    %235 = vmatprep.subr.mxu0 0.0
    %236 = vmatpush1.xpose.msra.mxu0 0.0
    %237 = vmatprep.subr.mxu0 0.0
    %238 = vmatpush1.xpose.msra.mxu0 0.0
    %239 = vmatprep.subr.mxu0 0.0
    %240 = vmatpush1.xpose.msra.mxu0 0.0
    %241 = vmatprep.subr.mxu0 0.0
    %242 = vmatpush1.xpose.msra.mxu0 0.0
    %243 = vmatprep.subr.mxu0 0.0
    %244 = vmatpush1.xpose.msra.mxu0 0.0
    %245 = vmatprep.subr.mxu0 0.0
    %246 = vmatpush1.xpose.msra.mxu0 0.0
    %247 = vmatprep.subr.mxu0 0.0
    %248 = vmatpush1.xpose.msra.mxu0 0.0
    %249 = vmatprep.subr.mxu0 0.0
    %250 = vmatpush1.xpose.msra.mxu0 0.0
    %251 = vmatprep.subr.mxu0 0.0
    %252 = vmatpush1.xpose.msra.mxu0 0.0
    %253 = vmatprep.subr.mxu0 0.0
    %254 = vmatpush1.xpose.msra.mxu0 0.0
    %255 = vmatprep.subr.mxu0 0.0
    %256 = vmatpush1.xpose.msra.mxu0 0.0
    %257 = vmatprep.subr.mxu0 0.0
    %258 = vmatpush1.xpose.msra.mxu0 0.0
    %259 = vmatprep.subr.mxu0 0.0
    %260 = vmatpush1.xpose.msra.mxu0 0.0
    %261 = vmatprep.subr.mxu0 0.0
    %262 = vmatpush1.xpose.msra.mxu0 0.0
    %263 = vmatprep.subr.mxu0 0.0
    %264 = vmatpush1.xpose.msra.mxu0 0.0
    %265 = vmatprep.subr.mxu0 0.0
    %266 = vmatpush1.xpose.msra.mxu0 0.0
    %267 = vmatprep.subr.mxu0 0.0
    %268 = vmatpush1.xpose.msra.mxu0 0.0
    %269 = vmatprep.mubr.f32.mxu0 0.0
    %270 = vmatmul.mubr.f32.gmra.mrb[0].mxu0 %v200
    %v271 = vpop.f32.mrb[0].mxu0
    %v272 = vadd.f32 0.0, %v271
    %v273 = vpop.f32.mrb[0].mxu0
    %274 = vdwg.mxu0
    %v275 = vtanh.pop %v196
    %v276 = vtanh.pop %v272
    %v278 = vsel %vm41, %v35, 0
    %280 = vmatprep.subr.mxu0 0.0
    %281 = vmatpush1.xpose.msra.mxu0 %v278
    %282 = vmatprep.subr.mxu0 0.0
    %283 = vmatpush1.xpose.msra.mxu0 0.0
    %284 = vmatprep.subr.mxu0 0.0
    %285 = vmatpush1.xpose.msra.mxu0 0.0
    %286 = vmatprep.subr.mxu0 0.0
    %287 = vmatpush1.xpose.msra.mxu0 0.0
    %288 = vmatprep.subr.mxu0 0.0
    %289 = vmatpush1.xpose.msra.mxu0 0.0
    %290 = vmatprep.subr.mxu0 0.0
    %291 = vmatpush1.xpose.msra.mxu0 0.0
    %292 = vmatprep.subr.mxu0 0.0
    %293 = vmatpush1.xpose.msra.mxu0 0.0
    %294 = vmatprep.subr.mxu0 0.0
    %295 = vmatpush1.xpose.msra.mxu0 0.0
    %296 = vmatprep.subr.mxu0 0.0
    %297 = vmatpush1.xpose.msra.mxu0 0.0
    %298 = vmatprep.subr.mxu0 0.0
    %299 = vmatpush1.xpose.msra.mxu0 0.0
    %300 = vmatprep.subr.mxu0 0.0
    %301 = vmatpush1.xpose.msra.mxu0 0.0
    %302 = vmatprep.subr.mxu0 0.0
    %303 = vmatpush1.xpose.msra.mxu0 0.0
    %304 = vmatprep.subr.mxu0 0.0
    %305 = vmatpush1.xpose.msra.mxu0 0.0
    %306 = vmatprep.subr.mxu0 0.0
    %307 = vmatpush1.xpose.msra.mxu0 0.0
    %308 = vmatprep.subr.mxu0 0.0
    %309 = vmatpush1.xpose.msra.mxu0 0.0
    %310 = vmatprep.subr.mxu0 0.0
    %311 = vmatpush1.xpose.msra.mxu0 0.0
    %312 = vmatprep.subr.mxu0 0.0
    %313 = vmatpush1.xpose.msra.mxu0 0.0
    %314 = vmatprep.subr.mxu0 0.0
    %315 = vmatpush1.xpose.msra.mxu0 0.0
    %316 = vmatprep.subr.mxu0 0.0
    %317 = vmatpush1.xpose.msra.mxu0 0.0
    %318 = vmatprep.subr.mxu0 0.0
    %319 = vmatpush1.xpose.msra.mxu0 0.0
    %320 = vmatprep.subr.mxu0 0.0
    %321 = vmatpush1.xpose.msra.mxu0 0.0
    %322 = vmatprep.subr.mxu0 0.0
    %323 = vmatpush1.xpose.msra.mxu0 0.0
    %324 = vmatprep.subr.mxu0 0.0
    %325 = vmatpush1.xpose.msra.mxu0 0.0
    %326 = vmatprep.subr.mxu0 0.0
    %327 = vmatpush1.xpose.msra.mxu0 0.0
    %328 = vmatprep.subr.mxu0 0.0
    %329 = vmatpush1.xpose.msra.mxu0 0.0
    %330 = vmatprep.subr.mxu0 0.0
    %331 = vmatpush1.xpose.msra.mxu0 0.0
    %332 = vmatprep.subr.mxu0 0.0
    %333 = vmatpush1.xpose.msra.mxu0 0.0
    %334 = vmatprep.subr.mxu0 0.0
    %335 = vmatpush1.xpose.msra.mxu0 0.0
    %336 = vmatprep.subr.mxu0 0.0
    %337 = vmatpush1.xpose.msra.mxu0 0.0
    %338 = vmatprep.subr.mxu0 0.0
    %339 = vmatpush1.xpose.msra.mxu0 0.0
    %340 = vmatprep.subr.mxu0 0.0
    %341 = vmatpush1.xpose.msra.mxu0 0.0
    %342 = vmatprep.subr.mxu0 0.0
    %343 = vmatpush1.xpose.msra.mxu0 0.0
    %344 = vmatprep.mubr.f32.mxu0 0.0
    %345 = vmatmul.mubr.f32.gmra.mrb[0].mxu0 %v124
    %v346 = vpop.f32.mrb[0].mxu0
    %v347 = vadd.f32 0.0, %v346
    %v348 = vpop.f32.mrb[0].mxu0
    %349 = vdwg.mxu0
    %v351 = vsel %vm41, %v36, 0
    %353 = vmatprep.subr.mxu0 0.0
    %354 = vmatpush1.xpose.msra.mxu0 %v351
    %355 = vmatprep.subr.mxu0 0.0
    %356 = vmatpush1.xpose.msra.mxu0 0.0
    %357 = vmatprep.subr.mxu0 0.0
    %358 = vmatpush1.xpose.msra.mxu0 0.0
    %359 = vmatprep.subr.mxu0 0.0
    %360 = vmatpush1.xpose.msra.mxu0 0.0
    %361 = vmatprep.subr.mxu0 0.0
    %362 = vmatpush1.xpose.msra.mxu0 0.0
    %363 = vmatprep.subr.mxu0 0.0
    %364 = vmatpush1.xpose.msra.mxu0 0.0
    %365 = vmatprep.subr.mxu0 0.0
    %366 = vmatpush1.xpose.msra.mxu0 0.0
    %367 = vmatprep.subr.mxu0 0.0
    %368 = vmatpush1.xpose.msra.mxu0 0.0
    %369 = vmatprep.subr.mxu0 0.0
    %370 = vmatpush1.xpose.msra.mxu0 0.0
    %371 = vmatprep.subr.mxu0 0.0
    %372 = vmatpush1.xpose.msra.mxu0 0.0
    %373 = vmatprep.subr.mxu0 0.0
    %374 = vmatpush1.xpose.msra.mxu0 0.0
    %375 = vmatprep.subr.mxu0 0.0
    %376 = vmatpush1.xpose.msra.mxu0 0.0
    %377 = vmatprep.subr.mxu0 0.0
    %378 = vmatpush1.xpose.msra.mxu0 0.0
    %379 = vmatprep.subr.mxu0 0.0
    %380 = vmatpush1.xpose.msra.mxu0 0.0
    %381 = vmatprep.subr.mxu0 0.0
    %382 = vmatpush1.xpose.msra.mxu0 0.0
    %383 = vmatprep.subr.mxu0 0.0
    %384 = vmatpush1.xpose.msra.mxu0 0.0
    %385 = vmatprep.subr.mxu0 0.0
    %386 = vmatpush1.xpose.msra.mxu0 0.0
    %387 = vmatprep.subr.mxu0 0.0
    %388 = vmatpush1.xpose.msra.mxu0 0.0
    %389 = vmatprep.subr.mxu0 0.0
    %390 = vmatpush1.xpose.msra.mxu0 0.0
    %391 = vmatprep.subr.mxu0 0.0
    %392 = vmatpush1.xpose.msra.mxu0 0.0
    %393 = vmatprep.subr.mxu0 0.0
    %394 = vmatpush1.xpose.msra.mxu0 0.0
    %395 = vmatprep.subr.mxu0 0.0
    %396 = vmatpush1.xpose.msra.mxu0 0.0
    %397 = vmatprep.subr.mxu0 0.0
    %398 = vmatpush1.xpose.msra.mxu0 0.0
    %399 = vmatprep.subr.mxu0 0.0
    %400 = vmatpush1.xpose.msra.mxu0 0.0
    %401 = vmatprep.subr.mxu0 0.0
    %402 = vmatpush1.xpose.msra.mxu0 0.0
    %403 = vmatprep.subr.mxu0 0.0
    %404 = vmatpush1.xpose.msra.mxu0 0.0
    %405 = vmatprep.subr.mxu0 0.0
    %406 = vmatpush1.xpose.msra.mxu0 0.0
    %407 = vmatprep.subr.mxu0 0.0
    %408 = vmatpush1.xpose.msra.mxu0 0.0
    %409 = vmatprep.subr.mxu0 0.0
    %410 = vmatpush1.xpose.msra.mxu0 0.0
    %411 = vmatprep.subr.mxu0 0.0
    %412 = vmatpush1.xpose.msra.mxu0 0.0
    %413 = vmatprep.subr.mxu0 0.0
    %414 = vmatpush1.xpose.msra.mxu0 0.0
    %415 = vmatprep.subr.mxu0 0.0
    %416 = vmatpush1.xpose.msra.mxu0 0.0
    %417 = vmatprep.mubr.f32.mxu0 0.0
    %418 = vmatmul.mubr.f32.gmra.mrb[0].mxu0 %v200
    %v419 = vpop.f32.mrb[0].mxu0
    %v420 = vadd.f32 0.0, %v419
    %v421 = vpop.f32.mrb[0].mxu0
    %422 = vdwg.mxu0
    %v423 = vtanh.pop %v347
    %v424 = vtanh.pop %v420
    %vm425 = vcmask 64512
    %v426 = vsel %vm425, %v275, 0.0
    %427 = vadd.xlane.f32.xlu0 %v426
    %v428 = vpop.xlane.xlu0 %427
    %v429 = vsel %vm425, %v276, 0.0
    %430 = vadd.xlane.f32.xlu0 %v429
    %v431 = vpop.xlane.xlu0 %430
    %v432 = vrcp.pop 8.0
    %v433 = vmul.f32 %v428, %v432
    %v434 = vmul.f32 %v431, %v432
    %v435 = vld [vmem:[%s4] sm:$0x3]
    %v437 = vlaneseq
    %v438 = vshrl.u32 %v437, 7
    %v439 = vsub.s32 0, %v438
    %v440 = vrot.slane %v435, %v439
    %442 = vbcast.lane.b32.xlu0 %v440, 256
    %v443 = vpop.permute.xlu0 %442
    %v444 = vlaneseq
    %v445 = vshrl.u32 %v444, 7
    %v446 = vsub.s32 1, %v445
    %v447 = vrot.slane %v435, %v446
    %449 = vbcast.lane.b32.xlu0 %v447, 256
    %v450 = vpop.permute.xlu0 %449
    %v453 = vadd.f32 %v433, %v443
    %v454 = vadd.f32 %v434, %v450
    %457 = vset.pattern.permute.xlu0 0
    %458 = vperm.xlu0 %457, %v453
    %v459 = vpop.permute.xlu0 %458
    %460 = vset.pattern.permute.xlu0 0
    %461 = vperm.xlu0 %460, %v454
    %v462 = vpop.permute.xlu0 %461
    %v463 = vlaneseq
    %v464 = vand.u32 %v463, 127
    %v465 = vlaneseq
    %v466 = vshrl.u32 %v465, 7
    %v467 = vsub.s32 %v464, %v466
    %v468 = vrot.slane %v459, %v467
    %v469 = vlaneseq
    %v470 = vshrl.u32 %v469, 7
    %v471 = vsub.s32 %v464, %v470
    %v472 = vrot.slane %v462, %v471
    %vm473 = vcmask 1041409
    %v474 = vsel %vm473, %v472, %v468
    %vm476 = vcmask 58368
    %v477 = vsel %vm476, %v474, -inf
    %478 = vmax.xlane.f32.xlu0 %v477
    %v479 = vpop.xlane.xlu0 %478
    %v481 = vlaneseq
    %v482 = vshrl.u32 %v481, 7
    %v483 = vsub.s32 0, %v482
    %v484 = vrot.slane %v479, %v483
    %v485 = vlaneseq
    %v486 = vshrl.u32 %v485, 7
    %v487 = vsub.s32 1, %v486
    %v488 = vrot.slane %v479, %v487
    %v491 = vsub.f32 %v453, %v484
    %v492 = vsub.f32 %v454, %v488
    %v493 = vmul.f32 %v491, 1.442695
    %v494 = vpow.pop %v493
    %v495 = vmul.f32 %v492, 1.442695
    %v496 = vpow.pop %v495
    %499 = vset.pattern.permute.xlu0 0
    %500 = vperm.xlu0 %499, %v494
    %v501 = vpop.permute.xlu0 %500
    %502 = vset.pattern.permute.xlu0 0
    %503 = vperm.xlu0 %502, %v496
    %v504 = vpop.permute.xlu0 %503
    %v505 = vlaneseq
    %v506 = vshrl.u32 %v505, 7
    %v507 = vsub.s32 %v464, %v506
    %v508 = vrot.slane %v501, %v507
    %v509 = vlaneseq
    %v510 = vshrl.u32 %v509, 7
    %v511 = vsub.s32 %v464, %v510
    %v512 = vrot.slane %v504, %v511
    %v513 = vsel %vm473, %v512, %v508
    %v515 = vsel %vm476, %v513, 0.0
    %516 = vadd.xlane.f32.xlu0 %v515
    %v517 = vpop.xlane.xlu0 %516
    %v518 = vrcp.pop %v517
    %v520 = vlaneseq
    %v521 = vshrl.u32 %v520, 7
    %v522 = vsub.s32 0, %v521
    %v523 = vrot.slane %v518, %v522
    %v524 = vlaneseq
    %v525 = vshrl.u32 %v524, 7
    %v526 = vsub.s32 1, %v525
    %v527 = vrot.slane %v518, %v526
    %v530 = vmul.f32 %v494, %v523
    %v531 = vmul.f32 %v496, %v527
    %v532 = vrot.slane %v426, 4
    %v533 = vadd.f32 %v426, %v532
    %v534 = vrot.slane %v533, 2
    %v535 = vadd.f32 %v533, %v534
    %v536 = vrot.slane %v535, 1
    %v537 = vadd.f32 %v535, %v536
    %v538 = vrot.slane %v429, 4
    %v539 = vadd.f32 %v429, %v538
    %v540 = vrot.slane %v539, 2
    %v541 = vadd.f32 %v539, %v540
    %v542 = vrot.slane %v541, 1
    %v543 = vadd.f32 %v541, %v542
    %v544 = vmul.f32 %v537, %v432
    %v545 = vmul.f32 %v543, %v432
    %v546 = vld [vmem:[%s5] sm:$0x3]
    %v548 = vrot.slane %v546, 1
    %v551 = vadd.f32 %v544, %v546
    %v552 = vadd.f32 %v545, %v548
    %v555 = vrot.slane %v552, 7
    %v556 = vsel %vm473, %v555, %v551
    %v558 = vsel %vm476, %v556, -inf
    %559 = vmax.xlane.f32.xlu0 %v558
    %v560 = vpop.xlane.xlu0 %559
    %v562 = vrot.slane %v560, 1
    %v565 = vsub.f32 %v551, %v560
    %v566 = vsub.f32 %v552, %v562
    %v567 = vmul.f32 %v565, 1.442695
    %v568 = vpow.pop %v567
    %v569 = vmul.f32 %v566, 1.442695
    %v570 = vpow.pop %v569
    %v573 = vrot.slane %v570, 7
    %v574 = vsel %vm473, %v573, %v568
    %v576 = vsel %vm476, %v574, 0.0
    %577 = vadd.xlane.f32.xlu0 %v576
    %v578 = vpop.xlane.xlu0 %577
    %v579 = vrcp.pop %v578
    %v581 = vrot.slane %v579, 1
    %v584 = vmul.f32 %v568, %v579
    %v585 = vmul.f32 %v570, %v581
    %v586 = vsel %vm425, %v423, 0.0
    %v587 = vrot.slane %v586, 4
    %v588 = vadd.f32 %v586, %v587
    %v589 = vrot.slane %v588, 2
    %v590 = vadd.f32 %v588, %v589
    %v591 = vrot.slane %v590, 1
    %v592 = vadd.f32 %v590, %v591
    %v593 = vsel %vm425, %v424, 0.0
    %v594 = vrot.slane %v593, 4
    %v595 = vadd.f32 %v593, %v594
    %v596 = vrot.slane %v595, 2
    %v597 = vadd.f32 %v595, %v596
    %v598 = vrot.slane %v597, 1
    %v599 = vadd.f32 %v597, %v598
    %v600 = vmul.f32 %v592, %v432
    %v601 = vmul.f32 %v599, %v432
    %v602 = vld [vmem:[%s6] sm:$0x3]
    %v604 = vrot.slane %v602, 1
    %v607 = vadd.f32 %v600, %v602
    %v608 = vadd.f32 %v601, %v604
    %v611 = vrot.slane %v608, 7
    %v612 = vsel %vm473, %v611, %v607
    %v614 = vsel %vm476, %v612, -inf
    %615 = vmax.xlane.f32.xlu0 %v614
    %v616 = vpop.xlane.xlu0 %615
    %v618 = vrot.slane %v616, 1
    %v621 = vsub.f32 %v607, %v616
    %v622 = vsub.f32 %v608, %v618
    %v623 = vmul.f32 %v621, 1.442695
    %v624 = vpow.pop %v623
    %v625 = vmul.f32 %v622, 1.442695
    %v626 = vpow.pop %v625
    %v629 = vrot.slane %v626, 7
    %v630 = vsel %vm473, %v629, %v624
    %v632 = vsel %vm476, %v630, 0.0
    %633 = vadd.xlane.f32.xlu0 %v632
    %v634 = vpop.xlane.xlu0 %633
    %v635 = vrcp.pop %v634
    %v637 = vrot.slane %v635, 1
    %v640 = vmul.f32 %v624, %v635
    %v641 = vmul.f32 %v626, %v637
    %643 = vset.pattern.permute.xlu0 0
    %644 = vperm.xlu0 %643, %v530
    %v645 = vpop.permute.xlu0 %644
    %648 = vset.pattern.permute.xlu0 0
    %649 = vperm.xlu0 %648, %v531
    %v650 = vpop.permute.xlu0 %649
    %v652 = vmul.f32 %v645, %v31
    %v653 = vmul.f32 %v650, %v32
    %v654 = vsel %vm41, %v652, 0.0
    %v655 = vrot.slane %v654, 4
    %v656 = vadd.f32 %v654, %v655
    %v657 = vrot.slane %v656, 2
    %v658 = vadd.f32 %v656, %v657
    %v659 = vrot.slane %v658, 1
    %v660 = vadd.f32 %v658, %v659
    %v661 = vsel %vm41, %v653, 0.0
    %v662 = vrot.slane %v661, 4
    %v663 = vadd.f32 %v661, %v662
    %v664 = vrot.slane %v663, 2
    %v665 = vadd.f32 %v663, %v664
    %v666 = vrot.slane %v665, 1
    %v667 = vadd.f32 %v665, %v666
    %v670 = vsel %vm473, %v667, %v660
    %vm672 = vcmask 254976
    %673 = vst.msk [vmem:[#allocation2] sm:$0x3] %vm672, %v670
    %v674 = vlaneseq
    %v675 = vshrl.u32 %v674, 7
    %v676 = vsub.s32 0, %v675
    %v677 = vrot.slane %v584, %v676
    %679 = vbcast.lane.b32.xlu0 %v677, 256
    %v680 = vpop.permute.xlu0 %679
    %v681 = vlaneseq
    %v682 = vshrl.u32 %v681, 7
    %v683 = vsub.s32 0, %v682
    %v684 = vrot.slane %v585, %v683
    %686 = vbcast.lane.b32.xlu0 %v684, 256
    %v687 = vpop.permute.xlu0 %686
    %v688 = vmul.f32 %v680, %v33
    %v689 = vmul.f32 %v687, %v34
    %v690 = vsel %vm41, %v688, 0.0
    %v691 = vrot.slane %v690, 4
    %v692 = vadd.f32 %v690, %v691
    %v693 = vrot.slane %v692, 2
    %v694 = vadd.f32 %v692, %v693
    %v695 = vrot.slane %v694, 1
    %v696 = vadd.f32 %v694, %v695
    %v697 = vsel %vm41, %v689, 0.0
    %v698 = vrot.slane %v697, 4
    %v699 = vadd.f32 %v697, %v698
    %v700 = vrot.slane %v699, 2
    %v701 = vadd.f32 %v699, %v700
    %v702 = vrot.slane %v701, 1
    %v703 = vadd.f32 %v701, %v702
    %v706 = vsel %vm473, %v703, %v696
    %708 = vst.msk [vmem:[#allocation4] sm:$0x3] %vm672, %v706
    %v709 = vlaneseq
    %v710 = vshrl.u32 %v709, 7
    %v711 = vsub.s32 0, %v710
    %v712 = vrot.slane %v640, %v711
    %714 = vbcast.lane.b32.xlu0 %v712, 256
    %v715 = vpop.permute.xlu0 %714
    %v716 = vlaneseq
    %v717 = vshrl.u32 %v716, 7
    %v718 = vsub.s32 0, %v717
    %v719 = vrot.slane %v641, %v718
    %721 = vbcast.lane.b32.xlu0 %v719, 256
    %v722 = vpop.permute.xlu0 %721
    %v723 = vmul.f32 %v715, %v35
    %v724 = vmul.f32 %v722, %v36
    %v725 = vsel %vm41, %v723, 0.0
    %v726 = vrot.slane %v725, 4
    %v727 = vadd.f32 %v725, %v726
    %v728 = vrot.slane %v727, 2
    %v729 = vadd.f32 %v727, %v728
    %v730 = vrot.slane %v729, 1
    %v731 = vadd.f32 %v729, %v730
    %v732 = vsel %vm41, %v724, 0.0
    %v733 = vrot.slane %v732, 4
    %v734 = vadd.f32 %v732, %v733
    %v735 = vrot.slane %v734, 2
    %v736 = vadd.f32 %v734, %v735
    %v737 = vrot.slane %v736, 1
    %v738 = vadd.f32 %v736, %v737
    %v741 = vsel %vm473, %v738, %v731
    %743 = vst.msk [vmem:[#allocation6] sm:$0x3] %vm672, %v741
    // Predicated region
    $region30: #{gap_forward.1} parent=1 // pred_check
      _
    $region31: #{gap_forward.1} parent=1 // pred_check_branch
      %745 = sbr.rel (0) target = $region33
    $region32: #{gap_forward.1} parent=1 // pred_region
      %s747 = ssub.s32 32, 32
      %748 = vsyncadd [#allocation3], %s747
      %s750 = sshll.u32 [#allocation2], 4
      %s751 = int_to_ptr.vmem [resolvable:$true] %s750
      %753 = dma.vmem_to_hbm [thread:$0]  %s751, 32, %s7, [#allocation3]
    $region33: #{gap_forward.1} parent=1 // pred_fallthru
      _
    // Predicated region
    $region34: #{gap_forward.1} parent=1 // pred_check
      _
    $region35: #{gap_forward.1} parent=1 // pred_check_branch
      %755 = sbr.rel (0) target = $region37
    $region36: #{gap_forward.1} parent=1 // pred_region
      %s757 = ssub.s32 32, 32
      %758 = vsyncadd [#allocation5], %s757
      %s760 = sshll.u32 [#allocation4], 4
      %s761 = int_to_ptr.vmem [resolvable:$true] %s760
      %763 = dma.vmem_to_hbm [thread:$0]  %s761, 32, %s8, [#allocation5]
    $region37: #{gap_forward.1} parent=1 // pred_fallthru
      _
    // Predicated region
    $region38: #{gap_forward.1} parent=1 // pred_check
      _
    $region39: #{gap_forward.1} parent=1 // pred_check_branch
      %765 = sbr.rel (0) target = $region41
    $region40: #{gap_forward.1} parent=1 // pred_region
      %s767 = ssub.s32 32, 32
      %768 = vsyncadd [#allocation5], %s767
      %s770 = sshll.u32 [#allocation6], 4
      %s771 = int_to_ptr.vmem [resolvable:$true] %s770
      %773 = dma.vmem_to_hbm [thread:$0]  %s771, 32, %s9, [#allocation5]
    $region41: #{gap_forward.1} parent=1 // pred_fallthru
      _
    // Predicated region
    $region42: #{gap_forward.1} parent=1 // pred_check
      _
    $region43: #{gap_forward.1} parent=1 // pred_check_branch
      %775 = sbr.rel (0) target = $region45
    $region44: #{gap_forward.1} parent=1 // pred_region
      %776 = dma.done [#allocation3], 32
    $region45: #{gap_forward.1} parent=1 // pred_fallthru
      _
    // Predicated region
    $region46: #{gap_forward.1} parent=1 // pred_check
      _
    $region47: #{gap_forward.1} parent=1 // pred_check_branch
      %778 = sbr.rel (0) target = $region49
    $region48: #{gap_forward.1} parent=1 // pred_region
      %779 = dma.done [#allocation5], 32
    $region49: #{gap_forward.1} parent=1 // pred_fallthru
      _
    // Predicated region
    $region50: #{gap_forward.1} parent=1 // pred_check
      _
    $region51: #{gap_forward.1} parent=1 // pred_check_branch
      %781 = sbr.rel (0) target = $region53
    $region52: #{gap_forward.1} parent=1 // pred_region
      %782 = dma.done [#allocation5], 32
    $region53: #{gap_forward.1} parent=1 // pred_fallthru
      _
    %783 = vsyncpa [#allocation3], 1
    %784 = vsyncpa [#allocation5], 1

</llo_original>
